<compile_context>
chip_gen: v7x
topology: tpu7x:2x2x1
jax: 0.10.0
libtpu: 0.0.40
codegen_flags: <defaults>
</compile_context>

<pallas_src>
import functools

import jax
import jax.numpy as jnp
import numpy as np
from jax.experimental import pallas as pl
from jax.experimental.pallas import tpu as pltpu


# ----------------------------------------------------------------------------
# One-time operator preparation (host side, float64 numpy -> f32 device arrays)
# ----------------------------------------------------------------------------
def _conv3x3_operator_np(w, H, W):
    """Dense linear operator of Conv2d(in_ch -> out_ch, 3, padding=1) acting on
    a flattened [in_ch][H][W] vector (zero padding via shift-matrix truncation)."""
    out_ch, in_ch = w.shape[0], w.shape[1]
    M = np.zeros((in_ch * H * W, out_ch * H * W))
    for dh in range(3):
        Sh = np.eye(H, H, k=1 - dh)
        for dw in range(3):
            Sw = np.eye(W, W, k=1 - dw)
            M += np.kron(w[:, :, dh, dw].T, np.kron(Sh, Sw))
    return M


def prepare_social_stgcnn(P, a, weight_dtype=jnp.float32, eps=1e-5):
    """One-time (per observation / planner step) folding of the social_stgcnn
    weights + adjacency into 4 dense lane operators and one packed bias array.
    A_obs changes only when the observation memory changes, so this cost is
    amortized over all candidate-action forwards of a planning step."""
    npP = {k: np.asarray(v, np.float64) for k, v in P.items()}
    a64 = np.asarray(a, np.float64)
    cout, cin = npP['wg'].shape
    Tp, T = npP['w1'].shape[0], npP['w1'].shape[1]
    V = a64.shape[1]
    TV = T * V
    L0, L1, L2 = cin * TV, cout * TV, Tp * cout * V
    L01 = L1 + L0

    def fold_bn(pfx):          # BatchNorm2d (eval) -> per-channel scale/shift
        g, b, m, var = npP[pfx + '_g'], npP[pfx + '_b'], npP[pfx + '_m'], npP[pfx + '_v']
        s = g / np.sqrt(var + eps)
        return s, b - m * s

    s1, h1 = fold_bn('bn1')
    s2, h2 = fold_bn('bn2')
    sr, hr = fold_bn('bnr')
    rep = lambda x, n: np.repeat(x, n)            # per-lane row in [c][t][v] order

    eyeTV, eyeV = np.eye(TV), np.eye(V)
    # gcn 1x1 conv as a flat-lane operator
    Wg = np.kron(npP['wg'].T, eyeTV)                                   # (L0, L1)
    # block-diagonal adjacency implementing einsum('nctv,tvw->nctw')
    A_bd = (np.eye(T)[:, None, :, None] * a64[:, :, None, :]).reshape(TV, TV)
    A_big = np.kron(np.eye(cout), A_bd)                                # (L1, L1)

    # ---- stage 0: gcn conv + bias + adjacency + BN1 scale folded into W0;
    #      identity passthrough of x (for the residual branch) on the last L0 cols
    s1v, h1v = rep(s1, TV), rep(h1, TV)
    W0 = np.concatenate([(Wg @ A_big) * s1v[None, :], np.eye(L0)], axis=1)     # (L0, L01)
    b0 = np.concatenate([(rep(npP['bg'], TV) @ A_big) * s1v + h1v, np.zeros(L0)])

    # ---- stage 1: temporal (3,1) conv + BN2, stacked with residual 1x1 conv + BNr
    Mt = sum(np.kron(npP['wt'][:, :, k].T, np.kron(np.eye(T, T, k=1 - k), eyeV))
             for k in range(3))                                        # (L1, L1)
    Mres = np.kron(npP['wr'].T, eyeTV)                                 # (L0, L1)
    s2v, h2v = rep(s2, TV), rep(h2, TV)
    srv, hrv = rep(sr, TV), rep(hr, TV)
    W1 = np.concatenate([Mt * s2v[None, :], Mres * srv[None, :]], axis=0)      # (L01, L1)
    b1 = rep(npP['bt'], TV) * s2v + h2v + rep(npP['br'], TV) * srv + hrv

    # ---- stages 2/3: the two 3x3 convs on the raw .view(N, T, C, V) relabeling
    M3 = _conv3x3_operator_np(npP['w1'], cout, V)                      # (L1, L2)
    M4 = _conv3x3_operator_np(npP['w2'], cout, V)                      # (L2, L2)
    b3 = rep(npP['b1'], cout * V)
    b4 = rep(npP['b2'], cout * V)

    # packed bias / per-lane PReLU-alpha rows (single VMEM operand)
    vec = np.zeros((5, L2))
    vec[0, :L01] = b0
    vec[1, :] = 1.0                                # passthrough lanes: identity
    vec[1, :L1] = float(npP['alpha1'][0])          # PReLU alpha1 on st_gcn lanes
    vec[2, :L1] = b1
    vec[3, :] = b3
    vec[4, :] = b4

    f32 = jnp.float32
    return dict(
        W0=jnp.asarray(W0, weight_dtype), W1=jnp.asarray(W1, weight_dtype),
        M3=jnp.asarray(M3, weight_dtype), M4=jnp.asarray(M4, weight_dtype),
        vec=jnp.asarray(vec, f32),
        alpha2=float(npP['alpha2'][0]), alpha_t=float(npP['alpha_t'][0]),
        dims=dict(cin=cin, cout=cout, T=T, Tp=Tp, V=V,
                  L0=L0, L1=L1, L01=L01, L2=L2,
                  lo=2 * Tp * V, hi=4 * Tp * V),
    )


# ----------------------------------------------------------------------------
# Fused kernel: social_stgcnn.forward + sx/sy/corr distribution head
# ----------------------------------------------------------------------------
def social_stgcnn_dist_forward(v, prep):
    """v: (N, input_feat, T, V) NCHW.  Returns (N, 5, pred_seq_len, V) with
    channels [mu_x, mu_y, exp(sx_raw), exp(sy_raw), tanh(corr_raw)]."""
    d = prep['dims']
    L0, L1, L01, L2 = d['L0'], d['L1'], d['L01'], d['L2']
    lo, hi = d['lo'], d['hi']
    a2, at = prep['alpha2'], prep['alpha_t']
    f32 = jnp.float32

    N = v.shape[0]
    # lane-dense layout: the whole contiguous NCHW buffer on the lane axis
    x = v.astype(f32).reshape(N, L0)

    def kernel(x_ref, w0_ref, w1_ref, m3_ref, m4_ref, vec_ref, out_ref):
        xx = x_ref[...]                                                # (bn, L0)
        # stage 0: gcn 1x1 conv + adjacency einsum + BN1 (pre-folded into W0);
        # lanes [0,L1): st_gcn hidden (PReLU alpha1 via vec row 1),
        # lanes [L1,L01): exact x passthrough for the residual branch (alpha=1)
        t0 = jnp.dot(xx, w0_ref[...], preferred_element_type=f32) + vec_ref[0:1, :L01]
        hx = jnp.where(t0 >= 0, t0, vec_ref[1:2, :L01] * t0)          # (bn, L01)
        # stage 1: merged [temporal (3,1) conv + BN2 | residual 1x1 conv + BNr], PReLU
        t1 = jnp.dot(hx, w1_ref[...], preferred_element_type=f32) + vec_ref[2:3, :L1]
        o = jnp.where(t1 >= 0, t1, a2 * t1)                           # (bn, L1)
        # stage 2: tpcnns[0] 3x3 conv on the raw .view(N,T,C,V) relabeling, PReLU
        t2 = jnp.dot(o, m3_ref[...], preferred_element_type=f32) + vec_ref[3:4, :]
        c1 = jnp.where(t2 >= 0, t2, at * t2)                          # (bn, L2)
        # stage 3: tpcnn_ouput 3x3 conv
        c2 = jnp.dot(c1, m4_ref[...], preferred_element_type=f32) + vec_ref[4:5, :]
        # distribution head epilogue (EUP): channel classes of the final raw view
        q = jax.lax.broadcasted_iota(jnp.int32, c2.shape, 1)
        out_ref[...] = jnp.where(q < lo, c2,
                                 jnp.where(q < hi, jnp.exp(c2), jnp.tanh(c2)))

    weights = (prep['W0'], prep['W1'], prep['M3'], prep['M4'], prep['vec'])

    if N == 1:
        # planner latency path: gridless, fully VMEM resident, single shot
        vm = pl.BlockSpec(memory_space=pltpu.MemorySpace.VMEM)
        out = pl.pallas_call(
            kernel,
            out_shape=jax.ShapeDtypeStruct((N, L2), f32),
            in_specs=[vm] * 6,
            out_specs=vm,
        )(x, *weights)
    else:
        # batched candidate actions / rollouts: tile N over sublane blocks and
        # mark the axis parallel so v7x shards the grid over its two TensorCores.
        bn = 8
        Np = pl.cdiv(N, bn) * bn
        if Np != N:
            x = jnp.pad(x, ((0, Np - N), (0, 0)))
        w_specs = [pl.BlockSpec(w.shape, lambda i: (0, 0)) for w in weights]
        out = pl.pallas_call(
            kernel,
            out_shape=jax.ShapeDtypeStruct((Np, L2), f32),
            grid=(Np // bn,),
            in_specs=[pl.BlockSpec((bn, L0), lambda i: (i, 0))] + w_specs,
            out_specs=pl.BlockSpec((bn, L2), lambda i: (i, 0)),
            compiler_params=pltpu.CompilerParams(
                dimension_semantics=("parallel",)),
        )(x, *weights)
        out = out[:N]

    # final raw .view(N, C, Tp, V) is just a relabeling of the contiguous buffer
    return out.reshape(N, d['cout'], d['Tp'], d['V'])


# ----------------------------------------------------------------------------
# Social_StatePredictor.forward (RGL_origin == False), holonomic kinematics
# ----------------------------------------------------------------------------
def social_state_predictor_forward(robot_state, action_vx, action_vy,
                                   V_obs, prep, time_step):
    # compute_next_state (kinematics == 'holonomic'): tiny scalar update, JAX glue
    rs = robot_state.reshape(-1)
    rs = rs.at[0].add(action_vx * time_step)
    rs = rs.at[1].add(action_vy * time_step)
    rs = rs.at[2].set(action_vx)
    rs = rs.at[3].set(action_vy)
    next_robot_state = rs[None, None, :]

    # TODO(synk): TrajectoryDataset(...).create(cur_memory) + DataLoader iteration are
    # host-side data plumbing; V_obs (input) and A_obs (folded into `prep`) replace them.
    V_obs_tmp = jnp.transpose(V_obs, (0, 3, 1, 2))              # permute(0,3,1,2) -> NCHW
    feat = social_stgcnn_dist_forward(V_obs_tmp, prep)[0]       # (5, Tp, V)

    mean = jnp.transpose(feat[0:2], (1, 2, 0))                  # (Tp, V, 2)
    sx, sy, corr = feat[2], feat[3], feat[4]                    # exp/exp/tanh done in-kernel
    off = corr * sx * sy
    cov = jnp.stack([jnp.stack([sx * sx, off], axis=-1),
                     jnp.stack([off, sy * sy], axis=-1)], axis=-2)
    # TODO(synk): torch.distributions.MultivariateNormal sampling and the numpy
    # seq_to_nodes / nodes_rel_to_nodes_abs post-processing are stochastic / host-side;
    # deterministic distribution parameters (mean, cov) are returned instead of `pred`.
    return next_robot_state, mean, cov


# ----------------------------------------------------------------------------
# Pure-JAX reference (einsum based) for correctness check
# ----------------------------------------------------------------------------
def _reference_stgcnn(v, a, P, eps=1e-5):
    def bc(x):
        return x[None, :, None, None]

    def fold(g, b, m, var):
        s = g / jnp.sqrt(var + eps)
        return s, b - m * s

    s1, h1 = fold(P['bn1_g'], P['bn1_b'], P['bn1_m'], P['bn1_v'])
    s2, h2 = fold(P['bn2_g'], P['bn2_b'], P['bn2_m'], P['bn2_v'])
    sr, hr = fold(P['bnr_g'], P['bnr_b'], P['bnr_m'], P['bnr_v'])
    N, cin, T, V = v.shape
    cout = P['wg'].shape[0]
    Tp = P['w1'].shape[0]

    y = jnp.einsum('oi,nitv->notv', P['wg'], v) + bc(P['bg'])
    z = jnp.einsum('nctv,tvw->nctw', y, a)
    h = z * bc(s1) + bc(h1)
    h = jnp.where(h >= 0, h, P['alpha1'][0] * h)
    hp = jnp.pad(h, ((0, 0), (0, 0), (1, 1), (0, 0)))
    tc = sum(jnp.einsum('oi,nitv->notv', P['wt'][:, :, k], hp[:, :, k:k + T, :])
             for k in range(3)) + bc(P['bt'])
    tc = tc * bc(s2) + bc(h2)
    res = jnp.einsum('oi,nitv->notv', P['wr'], v) + bc(P['br'])
    res = res * bc(sr) + bc(hr)
    o = tc + res
    o = jnp.where(o >= 0, o, P['alpha2'][0] * o)

    u = o.reshape(N, T, cout, V)
    up = jnp.pad(u, ((0, 0), (0, 0), (1, 1), (1, 1)))
    c1 = sum(jnp.einsum('oi,nihw->nohw', P['w1'][:, :, dh, dw],
                        up[:, :, dh:dh + cout, dw:dw + V])
             for dh in range(3) for dw in range(3)) + bc(P['b1'])
    c1 = jnp.where(c1 >= 0, c1, P['alpha_t'][0] * c1)
    c1p = jnp.pad(c1, ((0, 0), (0, 0), (1, 1), (1, 1)))
    c2 = sum(jnp.einsum('oi,nihw->nohw', P['w2'][:, :, dh, dw],
                        c1p[:, :, dh:dh + cout, dw:dw + V])
             for dh in range(3) for dw in range(3)) + bc(P['b2'])
    return c2.reshape(N, cout, Tp, V)


def _reference_head(c2):
    mu = c2[:, 0:2]
    sxy = jnp.exp(c2[:, 2:4])
    cr = jnp.tanh(c2[:, 4:5])
    return jnp.concatenate([mu, sxy, cr], axis=1)


# ----------------------------------------------------------------------------
# Deterministic parameter init (shapes from the module's __init__)
# ----------------------------------------------------------------------------
def init_params(key, cin=2, cout=5, T=8, Tp=12):
    ks = list(jax.random.split(key, 32))

    def nrm(shape, scale=0.3):
        return (scale * jax.random.normal(ks.pop(), shape)).astype(jnp.float32)

    def bn(c):
        g = (1.0 + 0.1 * jax.random.normal(ks.pop(), (c,))).astype(jnp.float32)
        b = (0.1 * jax.random.normal(ks.pop(), (c,))).astype(jnp.float32)
        m = (0.1 * jax.random.normal(ks.pop(), (c,))).astype(jnp.float32)
        v = (0.5 + jax.random.uniform(ks.pop(), (c,))).astype(jnp.float32)
        return g, b, m, v

    P = {}
    P['wg'], P['bg'] = nrm((cout, cin)), nrm((cout,), 0.1)          # gcn 1x1 conv
    P['bn1_g'], P['bn1_b'], P['bn1_m'], P['bn1_v'] = bn(cout)       # tcn BN #1
    P['alpha1'] = jnp.full((1,), 0.25, jnp.float32)                 # PReLU default
    P['wt'], P['bt'] = nrm((cout, cout, 3)), nrm((cout,), 0.1)      # temporal (3,1) conv
    P['bn2_g'], P['bn2_b'], P['bn2_m'], P['bn2_v'] = bn(cout)       # tcn BN #2
    P['wr'], P['br'] = nrm((cout, cin)), nrm((cout,), 0.1)          # residual 1x1 conv
    P['bnr_g'], P['bnr_b'], P['bnr_m'], P['bnr_v'] = bn(cout)       # residual BN
    P['alpha2'] = jnp.full((1,), 0.25, jnp.float32)
    P['w1'], P['b1'] = nrm((Tp, T, 3, 3), 0.15), nrm((Tp,), 0.1)    # tpcnns[0]
    P['alpha_t'] = jnp.full((1,), 0.25, jnp.float32)                # prelus[0]
    P['w2'], P['b2'] = nrm((Tp, Tp, 3, 3), 0.15), nrm((Tp,), 0.1)   # tpcnn_ouput
    return P


if __name__ == "__main__":
    key = jax.random.PRNGKey(0)
    k_in, k_a, k_rs, k_p, k_b = jax.random.split(key, 5)

    N, Vn = 1, 4                      # DataLoader uses batch_size=1; 4 pedestrians
    input_feat, output_feat = 2, 5
    seq_len, pred_seq_len = 8, 12
    time_step = 0.25

    V_obs = 0.5 * jax.random.normal(k_in, (N, seq_len, Vn, input_feat), dtype=jnp.float32)
    A_obs = jax.random.uniform(k_a, (seq_len, Vn, Vn), dtype=jnp.float32)
    robot_state = jax.random.normal(k_rs, (1, 1, 9), dtype=jnp.float32)
    action_vx = jnp.float32(0.3)
    action_vy = jnp.float32(-0.2)

    params = init_params(k_p, input_feat, output_feat, seq_len, pred_seq_len)

    # one-time operator preparation (per observation / planner step)
    prep = prepare_social_stgcnn(params, A_obs)

    # jitted forward closes over the prepared device-resident operators
    predict = jax.jit(functools.partial(social_state_predictor_forward,
                                        prep=prep, time_step=time_step))
    next_rs, mean, cov = predict(robot_state, action_vx, action_vy, V_obs)
    jax.block_until_ready((next_rs, mean, cov))

    # ---- correctness: fused Pallas kernel vs pure-JAX einsum reference (N=1 path)
    v_ref = _reference_stgcnn(jnp.transpose(V_obs, (0, 3, 1, 2)), A_obs, params)
    vp_ref = jnp.transpose(v_ref, (0, 2, 3, 1))[0]
    mean_ref = vp_ref[:, :, 0:2]
    sx_r = jnp.exp(vp_ref[:, :, 2])
    sy_r = jnp.exp(vp_ref[:, :, 3])
    cr_r = jnp.tanh(vp_ref[:, :, 4])
    off_r = cr_r * sx_r * sy_r
    cov_ref = jnp.stack([jnp.stack([sx_r * sx_r, off_r], -1),
                         jnp.stack([off_r, sy_r * sy_r], -1)], -2)
    assert np.allclose(np.asarray(mean), np.asarray(mean_ref), rtol=1e-3, atol=1e-3)
    assert np.allclose(np.asarray(cov), np.asarray(cov_ref), rtol=1e-3, atol=1e-3)
    assert next_rs.shape == (1, 1, 9)

    # ---- batched candidate-action path (grid over N, "parallel" for v7x 2 TCs)
    Nb = 16
    V_batch = 0.5 * jax.random.normal(k_b, (Nb, seq_len, Vn, input_feat), dtype=jnp.float32)
    batched = jax.jit(lambda Vo: social_stgcnn_dist_forward(
        jnp.transpose(Vo, (0, 3, 1, 2)), prep))
    feat_b = batched(V_batch)
    jax.block_until_ready(feat_b)
    ref_b = _reference_head(
        _reference_stgcnn(jnp.transpose(V_batch, (0, 3, 1, 2)), A_obs, params))
    assert np.allclose(np.asarray(feat_b), np.asarray(ref_b), rtol=1e-3, atol=1e-3)

    print("KERNEL_OK")
</pallas_src>

<mosaic_0001>
module attributes {stable_mosaic.version = 11 : i64} {
  func.func @kernel(%arg0: memref<1x64xf32, #tpu.memory_space<vmem>>, %arg1: memref<64x224xf32, #tpu.memory_space<vmem>>, %arg2: memref<224x160xf32, #tpu.memory_space<vmem>>, %arg3: memref<160x240xf32, #tpu.memory_space<vmem>>, %arg4: memref<240x240xf32, #tpu.memory_space<vmem>>, %arg5: memref<5x240xf32, #tpu.memory_space<vmem>>, %arg6: memref<1x240xf32, #tpu.memory_space<vmem>>) attributes {dimension_semantics = [], scalar_prefetch = 0 : i64, scratch_operands = 0 : i64, tpu.core_type = #tpu.core_type<tc>} {
    %c0 = arith.constant 0 : index
    %c0_0 = arith.constant 0 : index
    %0 = vector.load %arg0[%c0, %c0_0] : memref<1x64xf32, #tpu.memory_space<vmem>>, vector<1x64xf32>
    %c0_1 = arith.constant 0 : index
    %c0_2 = arith.constant 0 : index
    %1 = vector.load %arg1[%c0_1, %c0_2] : memref<64x224xf32, #tpu.memory_space<vmem>>, vector<64x224xf32>
    %cst = arith.constant dense<0.000000e+00> : vector<1x224xf32>
    %2 = tpu.matmul %0, %1, %cst {dimension_numbers = #tpu.dot_dimension_numbers<[1], [0], [0], [1], [0, 0, 1, 1], [], []>} : vector<1x64xf32>, vector<64x224xf32>, vector<1x224xf32> -> vector<1x224xf32>
    %c0_3 = arith.constant 0 : index
    %c0_4 = arith.constant 0 : index
    %3 = vector.load %arg5[%c0_3, %c0_4] : memref<5x240xf32, #tpu.memory_space<vmem>>, vector<1x224xf32>
    %4 = arith.addf %2, %3 : vector<1x224xf32>
    %cst_5 = arith.constant 0.000000e+00 : f32
    %5 = vector.broadcast %cst_5 : f32 to vector<1x224xf32>
    %6 = arith.cmpf oge, %4, %5 : vector<1x224xf32>
    %c1 = arith.constant 1 : index
    %c0_6 = arith.constant 0 : index
    %7 = vector.load %arg5[%c1, %c0_6] : memref<5x240xf32, #tpu.memory_space<vmem>>, vector<1x224xf32>
    %8 = arith.mulf %7, %4 : vector<1x224xf32>
    %9 = arith.select %6, %4, %8 : vector<1x224xi1>, vector<1x224xf32>
    %c0_7 = arith.constant 0 : index
    %c0_8 = arith.constant 0 : index
    %10 = vector.load %arg2[%c0_7, %c0_8] : memref<224x160xf32, #tpu.memory_space<vmem>>, vector<224x160xf32>
    %cst_9 = arith.constant dense<0.000000e+00> : vector<1x160xf32>
    %11 = tpu.matmul %9, %10, %cst_9 {dimension_numbers = #tpu.dot_dimension_numbers<[1], [0], [0], [1], [0, 0, 1, 1], [], []>} : vector<1x224xf32>, vector<224x160xf32>, vector<1x160xf32> -> vector<1x160xf32>
    %c2 = arith.constant 2 : index
    %c0_10 = arith.constant 0 : index
    %12 = vector.load %arg5[%c2, %c0_10] : memref<5x240xf32, #tpu.memory_space<vmem>>, vector<1x160xf32>
    %13 = arith.addf %11, %12 : vector<1x160xf32>
    %cst_11 = arith.constant 0.000000e+00 : f32
    %14 = vector.broadcast %cst_11 : f32 to vector<1x160xf32>
    %15 = arith.cmpf oge, %13, %14 : vector<1x160xf32>
    %cst_12 = arith.constant 2.500000e-01 : f32
    %16 = vector.broadcast %cst_12 : f32 to vector<1x160xf32>
    %17 = arith.mulf %16, %13 : vector<1x160xf32>
    %18 = arith.select %15, %13, %17 : vector<1x160xi1>, vector<1x160xf32>
    %c0_13 = arith.constant 0 : index
    %c0_14 = arith.constant 0 : index
    %19 = vector.load %arg3[%c0_13, %c0_14] : memref<160x240xf32, #tpu.memory_space<vmem>>, vector<160x240xf32>
    %cst_15 = arith.constant dense<0.000000e+00> : vector<1x240xf32>
    %20 = tpu.matmul %18, %19, %cst_15 {dimension_numbers = #tpu.dot_dimension_numbers<[1], [0], [0], [1], [0, 0, 1, 1], [], []>} : vector<1x160xf32>, vector<160x240xf32>, vector<1x240xf32> -> vector<1x240xf32>
    %c3 = arith.constant 3 : index
    %c0_16 = arith.constant 0 : index
    %21 = vector.load %arg5[%c3, %c0_16] : memref<5x240xf32, #tpu.memory_space<vmem>>, vector<1x240xf32>
    %22 = arith.addf %20, %21 : vector<1x240xf32>
    %cst_17 = arith.constant 0.000000e+00 : f32
    %23 = vector.broadcast %cst_17 : f32 to vector<1x240xf32>
    %24 = arith.cmpf oge, %22, %23 : vector<1x240xf32>
    %cst_18 = arith.constant 2.500000e-01 : f32
    %25 = vector.broadcast %cst_18 : f32 to vector<1x240xf32>
    %26 = arith.mulf %25, %22 : vector<1x240xf32>
    %27 = arith.select %24, %22, %26 : vector<1x240xi1>, vector<1x240xf32>
    %c0_19 = arith.constant 0 : index
    %c0_20 = arith.constant 0 : index
    %28 = vector.load %arg4[%c0_19, %c0_20] : memref<240x240xf32, #tpu.memory_space<vmem>>, vector<240x240xf32>
    %cst_21 = arith.constant dense<0.000000e+00> : vector<1x240xf32>
    %29 = tpu.matmul %27, %28, %cst_21 {dimension_numbers = #tpu.dot_dimension_numbers<[1], [0], [0], [1], [0, 0, 1, 1], [], []>} : vector<1x240xf32>, vector<240x240xf32>, vector<1x240xf32> -> vector<1x240xf32>
    %c4 = arith.constant 4 : index
    %c0_22 = arith.constant 0 : index
    %30 = vector.load %arg5[%c4, %c0_22] : memref<5x240xf32, #tpu.memory_space<vmem>>, vector<1x240xf32>
    %31 = arith.addf %29, %30 : vector<1x240xf32>
    %32 = tpu.iota {dimensions = array<i32: 1>} : vector<1x240xi32>
    %c96_i32 = arith.constant 96 : i32
    %33 = vector.broadcast %c96_i32 : i32 to vector<1x240xi32>
    %34 = arith.cmpi slt, %32, %33 : vector<1x240xi32>
    %c192_i32 = arith.constant 192 : i32
    %35 = vector.broadcast %c192_i32 : i32 to vector<1x240xi32>
    %36 = arith.cmpi slt, %32, %35 : vector<1x240xi32>
    %37 = math.exp %31 : vector<1x240xf32>
    %38 = math.tanh %31 : vector<1x240xf32>
    %39 = arith.select %36, %37, %38 : vector<1x240xi1>, vector<1x240xf32>
    %40 = arith.select %34, %31, %39 : vector<1x240xi1>, vector<1x240xf32>
    %c0_23 = arith.constant 0 : index
    %c0_24 = arith.constant 0 : index
    %41 = vector.load %arg6[%c0_23, %c0_24] : memref<1x240xf32, #tpu.memory_space<vmem>>, vector<1x240xf32>
    tpu.vector_store %arg6[%c0_23, %c0_24], %40 {strides = array<i32>} : memref<1x240xf32, #tpu.memory_space<vmem>>, vector<1x240xf32>,
    return
  }
}

</mosaic_0001>

<llo_original>
// kernel: social_state_predictor_forward.1
$region0: #{social_state_predictor_forward.1}
  #allocation0 [shape = 'u32[]', space=smem, size = 0x4, offset = 0x4, fixed_abs, tag = 'smem constant byte address 0x4 - core index']
  #allocation1 [shape = 'u32[144,128]{1,0:T(1,128)}', space=vmem, size = 0x12000, scoped, tag = 'internal scratch']
  %s0 = inlined_call_operand.vmem [shape: f32[1,64], index: 0, kind: input, shape index: {}]
  %s1 = inlined_call_operand.hbm [shape: f32[64,224], index: 1, kind: input, shape index: {}]
  %s2 = inlined_call_operand.hbm [shape: f32[224,160], index: 2, kind: input, shape index: {}]
  %s3 = inlined_call_operand.hbm [shape: f32[160,240], index: 3, kind: input, shape index: {}]
  %s4 = inlined_call_operand.hbm [shape: f32[240,240], index: 4, kind: input, shape index: {}]
  %s5 = inlined_call_operand.vmem [shape: f32[5,240], index: 5, kind: input, shape index: {}]
  %s6 = inlined_call_operand.vmem [shape: f32[1,240], index: 6, kind: output, shape index: {}]
  %s7 = sld [smem:[#allocation0]]
  $region50: #{social_state_predictor_forward.1} parent=0
    _
  %s9 = ssub.s32 1, %s7
  %s10 = scalar_select 0, %s9, %s7
  $region1: #{social_state_predictor_forward.1} parent=0
    #allocation2 [shape = 'u8[65536]{0}', space=vmem, size = 0x10000, scoped, tag = 'input window, operand 1, single buffered']
    #allocation3 [shape = 's32[1]{0}', space=sflag, size = 0x4, scoped, tag = 'scoped memory for social_state_predictor_forward.1']
    #allocation4 [shape = 'u8[229376]{0}', space=vmem, size = 0x38000, scoped, tag = 'input window, operand 2, single buffered']
    #allocation5 [shape = 's32[1]{0}', space=sflag, size = 0x4, scoped, tag = 'scoped memory for social_state_predictor_forward.1']
    #allocation6 [shape = 'u8[163840]{0}', space=vmem, size = 0x28000, scoped, tag = 'input window, operand 3, single buffered']
    #allocation7 [shape = 'u8[245760]{0}', space=vmem, size = 0x3c000, scoped, tag = 'input window, operand 4, single buffered']
    #allocation8 [shape = 's32[1]{0}', space=sflag, size = 0x4, scoped, tag = 'scoped memory for social_state_predictor_forward.1']
    %11 = vsyncpa [#allocation3], 0
    %12 = vsyncpa [#allocation5], 0
    %13 = vsyncpa [#allocation8], 0
    // Predicated region
    $region2: #{social_state_predictor_forward.1} parent=1 // pred_check
      _
    $region3: #{social_state_predictor_forward.1} parent=1 // pred_check_branch
      %15 = sbr.rel (0) target = $region5
    $region4: #{social_state_predictor_forward.1} parent=1 // pred_region
      _
    $region5: #{social_state_predictor_forward.1} parent=1 // pred_fallthru
      _
    // Predicated region
    $region6: #{social_state_predictor_forward.1} parent=1 // pred_check
      _
    $region7: #{social_state_predictor_forward.1} parent=1 // pred_check_branch
      %17 = sbr.rel (0) target = $region9
    $region8: #{social_state_predictor_forward.1} parent=1 // pred_region
      %s19 = ssub.s32 2048, 2048
      %20 = vsyncadd [#allocation3], %s19
      %s21 = sshll.u32 [#allocation2], 4
      %s22 = int_to_ptr.vmem [resolvable:$true] %s21
      %27 = dma.hbm_to_vmem [thread:$0]  %s1, 2048, %s22, [#allocation3], 256, 256, 16
    $region9: #{social_state_predictor_forward.1} parent=1 // pred_fallthru
      _
    // Predicated region
    $region10: #{social_state_predictor_forward.1} parent=1 // pred_check
      _
    $region11: #{social_state_predictor_forward.1} parent=1 // pred_check_branch
      %29 = sbr.rel (0) target = $region13
    $region12: #{social_state_predictor_forward.1} parent=1 // pred_region
      %s31 = ssub.s32 7168, 7168
      %32 = vsyncadd [#allocation5], %s31
      %s33 = sshll.u32 [#allocation4], 4
      %s34 = int_to_ptr.vmem [resolvable:$true] %s33
      %39 = dma.hbm_to_vmem [thread:$0]  %s2, 7168, %s34, [#allocation5], 256, 256, 16
    $region13: #{social_state_predictor_forward.1} parent=1 // pred_fallthru
      _
    // Predicated region
    $region14: #{social_state_predictor_forward.1} parent=1 // pred_check
      _
    $region15: #{social_state_predictor_forward.1} parent=1 // pred_check_branch
      %41 = sbr.rel (0) target = $region17
    $region16: #{social_state_predictor_forward.1} parent=1 // pred_region
      %s43 = ssub.s32 5120, 5120
      %44 = vsyncadd [#allocation5], %s43
      %s45 = sshll.u32 [#allocation6], 4
      %s46 = int_to_ptr.vmem [resolvable:$true] %s45
      %51 = dma.hbm_to_vmem [thread:$0]  %s3, 5120, %s46, [#allocation5], 256, 256, 16
    $region17: #{social_state_predictor_forward.1} parent=1 // pred_fallthru
      _
    // Predicated region
    $region18: #{social_state_predictor_forward.1} parent=1 // pred_check
      _
    $region19: #{social_state_predictor_forward.1} parent=1 // pred_check_branch
      %53 = sbr.rel (0) target = $region21
    $region20: #{social_state_predictor_forward.1} parent=1 // pred_region
      %s55 = ssub.s32 7680, 7680
      %56 = vsyncadd [#allocation8], %s55
      %s57 = sshll.u32 [#allocation7], 4
      %s58 = int_to_ptr.vmem [resolvable:$true] %s57
      %63 = dma.hbm_to_vmem [thread:$0]  %s4, 7680, %s58, [#allocation8], 256, 256, 16
    $region21: #{social_state_predictor_forward.1} parent=1 // pred_fallthru
      _
    // Predicated region
    $region22: #{social_state_predictor_forward.1} parent=1 // pred_check
      _
    $region23: #{social_state_predictor_forward.1} parent=1 // pred_check_branch
      %65 = sbr.rel (0) target = $region25
    $region24: #{social_state_predictor_forward.1} parent=1 // pred_region
      _
    $region25: #{social_state_predictor_forward.1} parent=1 // pred_fallthru
      _
    // Predicated region
    $region26: #{social_state_predictor_forward.1} parent=1 // pred_check
      _
    $region27: #{social_state_predictor_forward.1} parent=1 // pred_check_branch
      %67 = sbr.rel (0) target = $region29
    $region28: #{social_state_predictor_forward.1} parent=1 // pred_region
      %68 = dma.done [#allocation3], 2048
    $region29: #{social_state_predictor_forward.1} parent=1 // pred_fallthru
      _
    // Predicated region
    $region30: #{social_state_predictor_forward.1} parent=1 // pred_check
      _
    $region31: #{social_state_predictor_forward.1} parent=1 // pred_check_branch
      %70 = sbr.rel (0) target = $region33
    $region32: #{social_state_predictor_forward.1} parent=1 // pred_region
      %71 = dma.done [#allocation5], 7168
    $region33: #{social_state_predictor_forward.1} parent=1 // pred_fallthru
      _
    // Predicated region
    $region34: #{social_state_predictor_forward.1} parent=1 // pred_check
      _
    $region35: #{social_state_predictor_forward.1} parent=1 // pred_check_branch
      %73 = sbr.rel (0) target = $region37
    $region36: #{social_state_predictor_forward.1} parent=1 // pred_region
      %74 = dma.done [#allocation5], 5120
    $region37: #{social_state_predictor_forward.1} parent=1 // pred_fallthru
      _
    // Predicated region
    $region38: #{social_state_predictor_forward.1} parent=1 // pred_check
      _
    $region39: #{social_state_predictor_forward.1} parent=1 // pred_check_branch
      %76 = sbr.rel (0) target = $region41
    $region40: #{social_state_predictor_forward.1} parent=1 // pred_region
      %77 = dma.done [#allocation8], 7680
    $region41: #{social_state_predictor_forward.1} parent=1 // pred_fallthru
      _
    %v78 = vld [vmem:[%s0] sm:$0x1]
    %v79 = vld [vmem:[#allocation2] sm:$0xff]
    %v80 = vld [vmem:[#allocation2 + $0x8] sm:$0xff]
    %v81 = vld [vmem:[#allocation2 + $0x10] sm:$0xff]
    %v82 = vld [vmem:[#allocation2 + $0x18] sm:$0xff]
    %v83 = vld [vmem:[#allocation2 + $0x20] sm:$0xff]
    %v84 = vld [vmem:[#allocation2 + $0x28] sm:$0xff]
    %v85 = vld [vmem:[#allocation2 + $0x30] sm:$0xff]
    %v86 = vld [vmem:[#allocation2 + $0x38] sm:$0xff]
    %v87 = vld [vmem:[#allocation2 + $0x40] sm:$0xff]
    %v88 = vld [vmem:[#allocation2 + $0x48] sm:$0xff]
    %v89 = vld [vmem:[#allocation2 + $0x50] sm:$0xff]
    %v90 = vld [vmem:[#allocation2 + $0x58] sm:$0xff]
    %v91 = vld [vmem:[#allocation2 + $0x60] sm:$0xff]
    %v92 = vld [vmem:[#allocation2 + $0x68] sm:$0xff]
    %v93 = vld [vmem:[#allocation2 + $0x70] sm:$0xff]
    %v94 = vld [vmem:[#allocation2 + $0x78] sm:$0xff]
    %v95 = vld [vmem:[%s5] ss:$8 sm:$0x3]
    %v97 = vlaneseq
    %v98 = vshrl.u32 %v97, 7
    %v99 = vsub.s32 0, %v98
    %v100 = vrot.slane %v95, %v99
    %v101 = vlaneseq
    %v102 = vshrl.u32 %v101, 7
    %v103 = vsub.s32 1, %v102
    %v104 = vrot.slane %v95, %v103
    %vm107 = vcmask 523264
    %v109 = vsel %vm107, %v78, 0
    %111 = vmatprep.subr.mxu0 %v80
    %112 = vmatpush1.msra.mxu0 %v79
    %113 = vmatprep.subr.mxu0 %v82
    %114 = vmatpush1.msra.mxu0 %v81
    %115 = vmatprep.subr.mxu0 %v84
    %116 = vmatpush1.msra.mxu0 %v83
    %117 = vmatprep.subr.mxu0 %v86
    %118 = vmatpush1.msra.mxu0 %v85
    %119 = vmatprep.subr.mxu0 %v88
    %120 = vmatpush1.msra.mxu0 %v87
    %121 = vmatprep.subr.mxu0 %v90
    %122 = vmatpush1.msra.mxu0 %v89
    %123 = vmatprep.subr.mxu0 %v92
    %124 = vmatpush1.msra.mxu0 %v91
    %125 = vmatprep.subr.mxu0 %v94
    %126 = vmatpush1.msra.mxu0 %v93
    %127 = vmatprep.subr.mxu0 0.0
    %128 = vmatpush1.msra.mxu0 0.0
    %129 = vmatprep.subr.mxu0 0.0
    %130 = vmatpush1.msra.mxu0 0.0
    %131 = vmatprep.subr.mxu0 0.0
    %132 = vmatpush1.msra.mxu0 0.0
    %133 = vmatprep.subr.mxu0 0.0
    %134 = vmatpush1.msra.mxu0 0.0
    %135 = vmatprep.subr.mxu0 0.0
    %136 = vmatpush1.msra.mxu0 0.0
    %137 = vmatprep.subr.mxu0 0.0
    %138 = vmatpush1.msra.mxu0 0.0
    %139 = vmatprep.subr.mxu0 0.0
    %140 = vmatpush1.msra.mxu0 0.0
    %141 = vmatprep.subr.mxu0 0.0
    %142 = vmatpush1.msra.mxu0 0.0
    %143 = vmatprep.subr.mxu0 0.0
    %144 = vmatpush1.msra.mxu0 0.0
    %145 = vmatprep.subr.mxu0 0.0
    %146 = vmatpush1.msra.mxu0 0.0
    %147 = vmatprep.subr.mxu0 0.0
    %148 = vmatpush1.msra.mxu0 0.0
    %149 = vmatprep.subr.mxu0 0.0
    %150 = vmatpush1.msra.mxu0 0.0
    %151 = vmatprep.subr.mxu0 0.0
    %152 = vmatpush1.msra.mxu0 0.0
    %153 = vmatprep.subr.mxu0 0.0
    %154 = vmatpush1.msra.mxu0 0.0
    %155 = vmatprep.subr.mxu0 0.0
    %156 = vmatpush1.msra.mxu0 0.0
    %157 = vmatprep.subr.mxu0 0.0
    %158 = vmatpush1.msra.mxu0 0.0
    %159 = vmatprep.subr.mxu0 0.0
    %160 = vmatpush1.msra.mxu0 0.0
    %161 = vmatprep.subr.mxu0 0.0
    %162 = vmatpush1.msra.mxu0 0.0
    %163 = vmatprep.subr.mxu0 0.0
    %164 = vmatpush1.msra.mxu0 0.0
    %165 = vmatprep.subr.mxu0 0.0
    %166 = vmatpush1.msra.mxu0 0.0
    %167 = vmatprep.subr.mxu0 0.0
    %168 = vmatpush1.msra.mxu0 0.0
    %169 = vmatprep.subr.mxu0 0.0
    %170 = vmatpush1.msra.mxu0 0.0
    %171 = vmatprep.subr.mxu0 0.0
    %172 = vmatpush1.msra.mxu0 0.0
    %173 = vmatprep.subr.mxu0 0.0
    %174 = vmatpush1.msra.mxu0 0.0
    %175 = vmatprep.mubr.f32.mxu0 0.0
    %176 = vmatmul.mubr.f32.gmra.mrb[0].mxu0 %v109
    %v177 = vpop.f32.mrb[0].mxu0
    %v178 = vadd.f32 %v100, %v177
    %v179 = vpop.f32.mrb[0].mxu0
    %v180 = vadd.f32 %v104, %v179
    %181 = vdwg.mxu0
    %vm182 = vcmp.ge.f32.partialorder %v178, 0.0
    %vm183 = vcmp.ge.f32.partialorder %v180, 0.0
    %s184 = scalar_lea.vmem %s5, 1
    %v185 = vld [vmem:[%s184] ss:$8 sm:$0x3]
    %v188 = vcombine.low %v178, %v180
    %v190 = vunpack.c.l.s4 1966171168
    %v191 = vunpack.c.0.s8 %v190
    %v192 = vlaneseq
    %v193 = vshrl.u32 %v192, 7
    %v194 = vsub.s32 %v191, %v193
    %v195 = vrot.slane %v188, %v194
    %v197 = vunpack.c.l.s4 1966171168
    %v198 = vunpack.c.0.s8 %v197
    %v199 = vlaneseq
    %v200 = vshrl.u32 %v199, 7
    %v201 = vsub.s32 %v198, %v200
    %v202 = vrot.slane %v195, %v201
    %v204 = vmul.f32 %v185, %v202
    %v206 = vlaneseq
    %v207 = vshrl.u32 %v206, 7
    %v208 = vsub.s32 0, %v207
    %v209 = vrot.slane %v204, %v208
    %v210 = vlaneseq
    %v211 = vshrl.u32 %v210, 7
    %v212 = vsub.s32 1, %v211
    %v213 = vrot.slane %v204, %v212
    %v216 = vsel %vm182, %v178, %v209
    %v217 = vsel %vm183, %v180, %v213
    %v218 = vld [vmem:[#allocation4] sm:$0xff]
    %v219 = vld [vmem:[#allocation4 + $0x8] sm:$0xff]
    %v220 = vld [vmem:[#allocation4 + $0x10] sm:$0xff]
    %v221 = vld [vmem:[#allocation4 + $0x18] sm:$0xff]
    %v222 = vld [vmem:[#allocation4 + $0x20] sm:$0xff]
    %v223 = vld [vmem:[#allocation4 + $0x28] sm:$0xff]
    %v224 = vld [vmem:[#allocation4 + $0x30] sm:$0xff]
    %v225 = vld [vmem:[#allocation4 + $0x38] sm:$0xff]
    %v226 = vld [vmem:[#allocation4 + $0x40] sm:$0xff]
    %v227 = vld [vmem:[#allocation4 + $0x48] sm:$0xff]
    %v228 = vld [vmem:[#allocation4 + $0x50] sm:$0xff]
    %v229 = vld [vmem:[#allocation4 + $0x58] sm:$0xff]
    %v230 = vld [vmem:[#allocation4 + $0x60] sm:$0xff]
    %v231 = vld [vmem:[#allocation4 + $0x68] sm:$0xff]
    %v232 = vld [vmem:[#allocation4 + $0x70] sm:$0xff]
    %v233 = vld [vmem:[#allocation4 + $0x78] sm:$0xff]
    %v234 = vld [vmem:[#allocation4 + $0x80] sm:$0xff]
    %v235 = vld [vmem:[#allocation4 + $0x88] sm:$0xff]
    %v236 = vld [vmem:[#allocation4 + $0x90] sm:$0xff]
    %v237 = vld [vmem:[#allocation4 + $0x98] sm:$0xff]
    %v238 = vld [vmem:[#allocation4 + $0xa0] sm:$0xff]
    %v239 = vld [vmem:[#allocation4 + $0xa8] sm:$0xff]
    %v240 = vld [vmem:[#allocation4 + $0xb0] sm:$0xff]
    %v241 = vld [vmem:[#allocation4 + $0xb8] sm:$0xff]
    %v242 = vld [vmem:[#allocation4 + $0xc0] sm:$0xff]
    %v243 = vld [vmem:[#allocation4 + $0xc8] sm:$0xff]
    %v244 = vld [vmem:[#allocation4 + $0xd0] sm:$0xff]
    %v245 = vld [vmem:[#allocation4 + $0xd8] sm:$0xff]
    %v246 = vld [vmem:[#allocation4 + $0xe0] sm:$0xff]
    %v247 = vld [vmem:[#allocation4 + $0xe8] sm:$0xff]
    %v248 = vld [vmem:[#allocation4 + $0xf0] sm:$0xff]
    %v249 = vld [vmem:[#allocation4 + $0xf8] sm:$0xff]
    %v250 = vld [vmem:[#allocation4 + $0x100] sm:$0xff]
    %v251 = vld [vmem:[#allocation4 + $0x108] sm:$0xff]
    %v252 = vld [vmem:[#allocation4 + $0x110] sm:$0xff]
    %v253 = vld [vmem:[#allocation4 + $0x118] sm:$0xff]
    %v254 = vld [vmem:[#allocation4 + $0x120] sm:$0xff]
    %v255 = vld [vmem:[#allocation4 + $0x128] sm:$0xff]
    %v256 = vld [vmem:[#allocation4 + $0x130] sm:$0xff]
    %v257 = vld [vmem:[#allocation4 + $0x138] sm:$0xff]
    %v258 = vld [vmem:[#allocation4 + $0x140] sm:$0xff]
    %v259 = vld [vmem:[#allocation4 + $0x148] sm:$0xff]
    %v260 = vld [vmem:[#allocation4 + $0x150] sm:$0xff]
    %v261 = vld [vmem:[#allocation4 + $0x158] sm:$0xff]
    %v262 = vld [vmem:[#allocation4 + $0x160] sm:$0xff]
    %v263 = vld [vmem:[#allocation4 + $0x168] sm:$0xff]
    %v264 = vld [vmem:[#allocation4 + $0x170] sm:$0xff]
    %v265 = vld [vmem:[#allocation4 + $0x178] sm:$0xff]
    %v266 = vld [vmem:[#allocation4 + $0x180] sm:$0xff]
    %v267 = vld [vmem:[#allocation4 + $0x188] sm:$0xff]
    %v268 = vld [vmem:[#allocation4 + $0x190] sm:$0xff]
    %v269 = vld [vmem:[#allocation4 + $0x198] sm:$0xff]
    %v270 = vld [vmem:[#allocation4 + $0x1a0] sm:$0xff]
    %v271 = vld [vmem:[#allocation4 + $0x1a8] sm:$0xff]
    %v272 = vld [vmem:[#allocation4 + $0x1b0] sm:$0xff]
    %v273 = vld [vmem:[#allocation4 + $0x1b8] sm:$0xff]
    %s274 = scalar_lea.vmem %s5, 2
    %v275 = vld [vmem:[%s274] ss:$8 sm:$0x3]
    %v277 = vlaneseq
    %v278 = vshrl.u32 %v277, 7
    %v279 = vsub.s32 0, %v278
    %v280 = vrot.slane %v275, %v279
    %v281 = vlaneseq
    %v282 = vshrl.u32 %v281, 7
    %v283 = vsub.s32 1, %v282
    %v284 = vrot.slane %v275, %v283
    %vm287 = vcmask 785408
    %v289 = vsel %vm287, %v217, 0
    %291 = vmatprep.subr.mxu0 %v219
    %292 = vmatpush1.msra.mxu0 %v218
    %293 = vmatprep.subr.mxu0 %v221
    %294 = vmatpush1.msra.mxu0 %v220
    %295 = vmatprep.subr.mxu0 %v223
    %296 = vmatpush1.msra.mxu0 %v222
    %297 = vmatprep.subr.mxu0 %v225
    %298 = vmatpush1.msra.mxu0 %v224
    %299 = vmatprep.subr.mxu0 %v227
    %300 = vmatpush1.msra.mxu0 %v226
    %301 = vmatprep.subr.mxu0 %v229
    %302 = vmatpush1.msra.mxu0 %v228
    %303 = vmatprep.subr.mxu0 %v231
    %304 = vmatpush1.msra.mxu0 %v230
    %305 = vmatprep.subr.mxu0 %v233
    %306 = vmatpush1.msra.mxu0 %v232
    %307 = vmatprep.subr.mxu0 %v235
    %308 = vmatpush1.msra.mxu0 %v234
    %309 = vmatprep.subr.mxu0 %v237
    %310 = vmatpush1.msra.mxu0 %v236
    %311 = vmatprep.subr.mxu0 %v239
    %312 = vmatpush1.msra.mxu0 %v238
    %313 = vmatprep.subr.mxu0 %v241
    %314 = vmatpush1.msra.mxu0 %v240
    %315 = vmatprep.subr.mxu0 %v243
    %316 = vmatpush1.msra.mxu0 %v242
    %317 = vmatprep.subr.mxu0 %v245
    %318 = vmatpush1.msra.mxu0 %v244
    %319 = vmatprep.subr.mxu0 %v247
    %320 = vmatpush1.msra.mxu0 %v246
    %321 = vmatprep.subr.mxu0 %v249
    %322 = vmatpush1.msra.mxu0 %v248
    %323 = vmatprep.subr.mxu0 %v251
    %324 = vmatpush1.msra.mxu0 %v250
    %325 = vmatprep.subr.mxu0 %v253
    %326 = vmatpush1.msra.mxu0 %v252
    %327 = vmatprep.subr.mxu0 %v255
    %328 = vmatpush1.msra.mxu0 %v254
    %329 = vmatprep.subr.mxu0 %v257
    %330 = vmatpush1.msra.mxu0 %v256
    %331 = vmatprep.subr.mxu0 %v259
    %332 = vmatpush1.msra.mxu0 %v258
    %333 = vmatprep.subr.mxu0 %v261
    %334 = vmatpush1.msra.mxu0 %v260
    %335 = vmatprep.subr.mxu0 %v263
    %336 = vmatpush1.msra.mxu0 %v262
    %337 = vmatprep.subr.mxu0 %v265
    %338 = vmatpush1.msra.mxu0 %v264
    %339 = vmatprep.subr.mxu0 %v267
    %340 = vmatpush1.msra.mxu0 %v266
    %341 = vmatprep.subr.mxu0 %v269
    %342 = vmatpush1.msra.mxu0 %v268
    %343 = vmatprep.subr.mxu0 %v271
    %344 = vmatpush1.msra.mxu0 %v270
    %345 = vmatprep.subr.mxu0 %v273
    %346 = vmatpush1.msra.mxu0 %v272
    %347 = vmatprep.subr.mxu0 0.0
    %348 = vmatpush1.msra.mxu0 0.0
    %349 = vmatprep.subr.mxu0 0.0
    %350 = vmatpush1.msra.mxu0 0.0
    %351 = vmatprep.subr.mxu0 0.0
    %352 = vmatpush1.msra.mxu0 0.0
    %353 = vmatprep.subr.mxu0 0.0
    %354 = vmatpush1.msra.mxu0 0.0
    %355 = vmatprep.mubr.f32.mxu0 %v289
    %356 = vmatmul.mubr.f32.gmra.mrb[0].mxu0 %v216
    %v357 = vpop.f32.mrb[0].mxu0
    %v358 = vadd.f32 %v280, %v357
    %v359 = vpop.f32.mrb[0].mxu0
    %v360 = vadd.f32 %v284, %v359
    %361 = vdwg.mxu0
    %vm362 = vcmp.ge.f32.partialorder %v358, 0.0
    %vm363 = vcmp.ge.f32.partialorder %v360, 0.0
    %v364 = vmul.f32 %v358, 0.25
    %v365 = vmul.f32 %v360, 0.25
    %v366 = vsel %vm362, %v358, %v364
    %v367 = vsel %vm363, %v360, %v365
    %v368 = vld [vmem:[#allocation6] sm:$0xff]
    %v369 = vld [vmem:[#allocation6 + $0x8] sm:$0xff]
    %v370 = vld [vmem:[#allocation6 + $0x10] sm:$0xff]
    %v371 = vld [vmem:[#allocation6 + $0x18] sm:$0xff]
    %v372 = vld [vmem:[#allocation6 + $0x20] sm:$0xff]
    %v373 = vld [vmem:[#allocation6 + $0x28] sm:$0xff]
    %v374 = vld [vmem:[#allocation6 + $0x30] sm:$0xff]
    %v375 = vld [vmem:[#allocation6 + $0x38] sm:$0xff]
    %v376 = vld [vmem:[#allocation6 + $0x40] sm:$0xff]
    %v377 = vld [vmem:[#allocation6 + $0x48] sm:$0xff]
    %v378 = vld [vmem:[#allocation6 + $0x50] sm:$0xff]
    %v379 = vld [vmem:[#allocation6 + $0x58] sm:$0xff]
    %v380 = vld [vmem:[#allocation6 + $0x60] sm:$0xff]
    %v381 = vld [vmem:[#allocation6 + $0x68] sm:$0xff]
    %v382 = vld [vmem:[#allocation6 + $0x70] sm:$0xff]
    %v383 = vld [vmem:[#allocation6 + $0x78] sm:$0xff]
    %v384 = vld [vmem:[#allocation6 + $0x80] sm:$0xff]
    %v385 = vld [vmem:[#allocation6 + $0x88] sm:$0xff]
    %v386 = vld [vmem:[#allocation6 + $0x90] sm:$0xff]
    %v387 = vld [vmem:[#allocation6 + $0x98] sm:$0xff]
    %v388 = vld [vmem:[#allocation6 + $0xa0] sm:$0xff]
    %v389 = vld [vmem:[#allocation6 + $0xa8] sm:$0xff]
    %v390 = vld [vmem:[#allocation6 + $0xb0] sm:$0xff]
    %v391 = vld [vmem:[#allocation6 + $0xb8] sm:$0xff]
    %v392 = vld [vmem:[#allocation6 + $0xc0] sm:$0xff]
    %v393 = vld [vmem:[#allocation6 + $0xc8] sm:$0xff]
    %v394 = vld [vmem:[#allocation6 + $0xd0] sm:$0xff]
    %v395 = vld [vmem:[#allocation6 + $0xd8] sm:$0xff]
    %v396 = vld [vmem:[#allocation6 + $0xe0] sm:$0xff]
    %v397 = vld [vmem:[#allocation6 + $0xe8] sm:$0xff]
    %v398 = vld [vmem:[#allocation6 + $0xf0] sm:$0xff]
    %v399 = vld [vmem:[#allocation6 + $0xf8] sm:$0xff]
    %v400 = vld [vmem:[#allocation6 + $0x100] sm:$0xff]
    %v401 = vld [vmem:[#allocation6 + $0x108] sm:$0xff]
    %v402 = vld [vmem:[#allocation6 + $0x110] sm:$0xff]
    %v403 = vld [vmem:[#allocation6 + $0x118] sm:$0xff]
    %v404 = vld [vmem:[#allocation6 + $0x120] sm:$0xff]
    %v405 = vld [vmem:[#allocation6 + $0x128] sm:$0xff]
    %v406 = vld [vmem:[#allocation6 + $0x130] sm:$0xff]
    %v407 = vld [vmem:[#allocation6 + $0x138] sm:$0xff]
    %s408 = scalar_lea.vmem %s5, 3
    %v409 = vld [vmem:[%s408] ss:$8 sm:$0x3]
    %v411 = vlaneseq
    %v412 = vshrl.u32 %v411, 7
    %v413 = vsub.s32 0, %v412
    %v414 = vrot.slane %v409, %v413
    %v415 = vlaneseq
    %v416 = vshrl.u32 %v415, 7
    %v417 = vsub.s32 1, %v416
    %v418 = vrot.slane %v409, %v417
    %vm421 = vcmask 261120
    %v423 = vsel %vm421, %v367, 0
    %425 = vmatprep.subr.mxu0 %v369
    %426 = vmatpush1.msra.mxu0 %v368
    %427 = vmatprep.subr.mxu0 %v371
    %428 = vmatpush1.msra.mxu0 %v370
    %429 = vmatprep.subr.mxu0 %v373
    %430 = vmatpush1.msra.mxu0 %v372
    %431 = vmatprep.subr.mxu0 %v375
    %432 = vmatpush1.msra.mxu0 %v374
    %433 = vmatprep.subr.mxu0 %v377
    %434 = vmatpush1.msra.mxu0 %v376
    %435 = vmatprep.subr.mxu0 %v379
    %436 = vmatpush1.msra.mxu0 %v378
    %437 = vmatprep.subr.mxu0 %v381
    %438 = vmatpush1.msra.mxu0 %v380
    %439 = vmatprep.subr.mxu0 %v383
    %440 = vmatpush1.msra.mxu0 %v382
    %441 = vmatprep.subr.mxu0 %v385
    %442 = vmatpush1.msra.mxu0 %v384
    %443 = vmatprep.subr.mxu0 %v387
    %444 = vmatpush1.msra.mxu0 %v386
    %445 = vmatprep.subr.mxu0 %v389
    %446 = vmatpush1.msra.mxu0 %v388
    %447 = vmatprep.subr.mxu0 %v391
    %448 = vmatpush1.msra.mxu0 %v390
    %449 = vmatprep.subr.mxu0 %v393
    %450 = vmatpush1.msra.mxu0 %v392
    %451 = vmatprep.subr.mxu0 %v395
    %452 = vmatpush1.msra.mxu0 %v394
    %453 = vmatprep.subr.mxu0 %v397
    %454 = vmatpush1.msra.mxu0 %v396
    %455 = vmatprep.subr.mxu0 %v399
    %456 = vmatpush1.msra.mxu0 %v398
    %457 = vmatprep.subr.mxu0 %v401
    %458 = vmatpush1.msra.mxu0 %v400
    %459 = vmatprep.subr.mxu0 %v403
    %460 = vmatpush1.msra.mxu0 %v402
    %461 = vmatprep.subr.mxu0 %v405
    %462 = vmatpush1.msra.mxu0 %v404
    %463 = vmatprep.subr.mxu0 %v407
    %464 = vmatpush1.msra.mxu0 %v406
    %465 = vmatprep.subr.mxu0 0.0
    %466 = vmatpush1.msra.mxu0 0.0
    %467 = vmatprep.subr.mxu0 0.0
    %468 = vmatpush1.msra.mxu0 0.0
    %469 = vmatprep.subr.mxu0 0.0
    %470 = vmatpush1.msra.mxu0 0.0
    %471 = vmatprep.subr.mxu0 0.0
    %472 = vmatpush1.msra.mxu0 0.0
    %473 = vmatprep.subr.mxu0 0.0
    %474 = vmatpush1.msra.mxu0 0.0
    %475 = vmatprep.subr.mxu0 0.0
    %476 = vmatpush1.msra.mxu0 0.0
    %477 = vmatprep.subr.mxu0 0.0
    %478 = vmatpush1.msra.mxu0 0.0
    %479 = vmatprep.subr.mxu0 0.0
    %480 = vmatpush1.msra.mxu0 0.0
    %481 = vmatprep.subr.mxu0 0.0
    %482 = vmatpush1.msra.mxu0 0.0
    %483 = vmatprep.subr.mxu0 0.0
    %484 = vmatpush1.msra.mxu0 0.0
    %485 = vmatprep.subr.mxu0 0.0
    %486 = vmatpush1.msra.mxu0 0.0
    %487 = vmatprep.subr.mxu0 0.0
    %488 = vmatpush1.msra.mxu0 0.0
    %489 = vmatprep.mubr.f32.mxu0 %v423
    %490 = vmatmul.mubr.f32.gmra.mrb[0].mxu0 %v366
    %v491 = vpop.f32.mrb[0].mxu0
    %v492 = vadd.f32 %v414, %v491
    %v493 = vpop.f32.mrb[0].mxu0
    %v494 = vadd.f32 %v418, %v493
    %495 = vdwg.mxu0
    %vm496 = vcmp.ge.f32.partialorder %v492, 0.0
    %vm497 = vcmp.ge.f32.partialorder %v494, 0.0
    %v498 = vmul.f32 %v492, 0.25
    %v499 = vmul.f32 %v494, 0.25
    %v500 = vsel %vm496, %v492, %v498
    %v501 = vsel %vm497, %v494, %v499
    %v502 = vld [vmem:[#allocation7] sm:$0xff]
    %v503 = vld [vmem:[#allocation7 + $0x8] sm:$0xff]
    %v504 = vld [vmem:[#allocation7 + $0x10] sm:$0xff]
    %v505 = vld [vmem:[#allocation7 + $0x18] sm:$0xff]
    %v506 = vld [vmem:[#allocation7 + $0x20] sm:$0xff]
    %v507 = vld [vmem:[#allocation7 + $0x28] sm:$0xff]
    %v508 = vld [vmem:[#allocation7 + $0x30] sm:$0xff]
    %v509 = vld [vmem:[#allocation7 + $0x38] sm:$0xff]
    %v510 = vld [vmem:[#allocation7 + $0x40] sm:$0xff]
    %v511 = vld [vmem:[#allocation7 + $0x48] sm:$0xff]
    %v512 = vld [vmem:[#allocation7 + $0x50] sm:$0xff]
    %v513 = vld [vmem:[#allocation7 + $0x58] sm:$0xff]
    %v514 = vld [vmem:[#allocation7 + $0x60] sm:$0xff]
    %v515 = vld [vmem:[#allocation7 + $0x68] sm:$0xff]
    %v516 = vld [vmem:[#allocation7 + $0x70] sm:$0xff]
    %v517 = vld [vmem:[#allocation7 + $0x78] sm:$0xff]
    %v518 = vld [vmem:[#allocation7 + $0x80] sm:$0xff]
    %v519 = vld [vmem:[#allocation7 + $0x88] sm:$0xff]
    %v520 = vld [vmem:[#allocation7 + $0x90] sm:$0xff]
    %v521 = vld [vmem:[#allocation7 + $0x98] sm:$0xff]
    %v522 = vld [vmem:[#allocation7 + $0xa0] sm:$0xff]
    %v523 = vld [vmem:[#allocation7 + $0xa8] sm:$0xff]
    %v524 = vld [vmem:[#allocation7 + $0xb0] sm:$0xff]
    %v525 = vld [vmem:[#allocation7 + $0xb8] sm:$0xff]
    %v526 = vld [vmem:[#allocation7 + $0xc0] sm:$0xff]
    %v527 = vld [vmem:[#allocation7 + $0xc8] sm:$0xff]
    %v528 = vld [vmem:[#allocation7 + $0xd0] sm:$0xff]
    %v529 = vld [vmem:[#allocation7 + $0xd8] sm:$0xff]
    %v530 = vld [vmem:[#allocation7 + $0xe0] sm:$0xff]
    %v531 = vld [vmem:[#allocation7 + $0xe8] sm:$0xff]
    %v532 = vld [vmem:[#allocation7 + $0xf0] sm:$0xff]
    %v533 = vld [vmem:[#allocation7 + $0xf8] sm:$0xff]
    %v534 = vld [vmem:[#allocation7 + $0x100] sm:$0xff]
    %v535 = vld [vmem:[#allocation7 + $0x108] sm:$0xff]
    %v536 = vld [vmem:[#allocation7 + $0x110] sm:$0xff]
    %v537 = vld [vmem:[#allocation7 + $0x118] sm:$0xff]
    %v538 = vld [vmem:[#allocation7 + $0x120] sm:$0xff]
    %v539 = vld [vmem:[#allocation7 + $0x128] sm:$0xff]
    %v540 = vld [vmem:[#allocation7 + $0x130] sm:$0xff]
    %v541 = vld [vmem:[#allocation7 + $0x138] sm:$0xff]
    %v542 = vld [vmem:[#allocation7 + $0x140] sm:$0xff]
    %v543 = vld [vmem:[#allocation7 + $0x148] sm:$0xff]
    %v544 = vld [vmem:[#allocation7 + $0x150] sm:$0xff]
    %v545 = vld [vmem:[#allocation7 + $0x158] sm:$0xff]
    %v546 = vld [vmem:[#allocation7 + $0x160] sm:$0xff]
    %v547 = vld [vmem:[#allocation7 + $0x168] sm:$0xff]
    %v548 = vld [vmem:[#allocation7 + $0x170] sm:$0xff]
    %v549 = vld [vmem:[#allocation7 + $0x178] sm:$0xff]
    %v550 = vld [vmem:[#allocation7 + $0x180] sm:$0xff]
    %v551 = vld [vmem:[#allocation7 + $0x188] sm:$0xff]
    %v552 = vld [vmem:[#allocation7 + $0x190] sm:$0xff]
    %v553 = vld [vmem:[#allocation7 + $0x198] sm:$0xff]
    %v554 = vld [vmem:[#allocation7 + $0x1a0] sm:$0xff]
    %v555 = vld [vmem:[#allocation7 + $0x1a8] sm:$0xff]
    %v556 = vld [vmem:[#allocation7 + $0x1b0] sm:$0xff]
    %v557 = vld [vmem:[#allocation7 + $0x1b8] sm:$0xff]
    %v558 = vld [vmem:[#allocation7 + $0x1c0] sm:$0xff]
    %v559 = vld [vmem:[#allocation7 + $0x1c8] sm:$0xff]
    %v560 = vld [vmem:[#allocation7 + $0x1d0] sm:$0xff]
    %v561 = vld [vmem:[#allocation7 + $0x1d8] sm:$0xff]
    %s562 = scalar_lea.vmem %s5, 4
    %v563 = vld [vmem:[%s562] ss:$8 sm:$0x3]
    %v565 = vlaneseq
    %v566 = vshrl.u32 %v565, 7
    %v567 = vsub.s32 0, %v566
    %v568 = vrot.slane %v563, %v567
    %v569 = vlaneseq
    %v570 = vshrl.u32 %v569, 7
    %v571 = vsub.s32 1, %v570
    %v572 = vrot.slane %v563, %v571
    %vm575 = vcmask 916480
    %v577 = vsel %vm575, %v501, 0
    %579 = vmatprep.subr.mxu0 %v503
    %580 = vmatpush1.msra.mxu0 %v502
    %581 = vmatprep.subr.mxu0 %v505
    %582 = vmatpush1.msra.mxu0 %v504
    %583 = vmatprep.subr.mxu0 %v507
    %584 = vmatpush1.msra.mxu0 %v506
    %585 = vmatprep.subr.mxu0 %v509
    %586 = vmatpush1.msra.mxu0 %v508
    %587 = vmatprep.subr.mxu0 %v511
    %588 = vmatpush1.msra.mxu0 %v510
    %589 = vmatprep.subr.mxu0 %v513
    %590 = vmatpush1.msra.mxu0 %v512
    %591 = vmatprep.subr.mxu0 %v515
    %592 = vmatpush1.msra.mxu0 %v514
    %593 = vmatprep.subr.mxu0 %v517
    %594 = vmatpush1.msra.mxu0 %v516
    %595 = vmatprep.subr.mxu0 %v519
    %596 = vmatpush1.msra.mxu0 %v518
    %597 = vmatprep.subr.mxu0 %v521
    %598 = vmatpush1.msra.mxu0 %v520
    %599 = vmatprep.subr.mxu0 %v523
    %600 = vmatpush1.msra.mxu0 %v522
    %601 = vmatprep.subr.mxu0 %v525
    %602 = vmatpush1.msra.mxu0 %v524
    %603 = vmatprep.subr.mxu0 %v527
    %604 = vmatpush1.msra.mxu0 %v526
    %605 = vmatprep.subr.mxu0 %v529
    %606 = vmatpush1.msra.mxu0 %v528
    %607 = vmatprep.subr.mxu0 %v531
    %608 = vmatpush1.msra.mxu0 %v530
    %609 = vmatprep.subr.mxu0 %v533
    %610 = vmatpush1.msra.mxu0 %v532
    %611 = vmatprep.subr.mxu0 %v535
    %612 = vmatpush1.msra.mxu0 %v534
    %613 = vmatprep.subr.mxu0 %v537
    %614 = vmatpush1.msra.mxu0 %v536
    %615 = vmatprep.subr.mxu0 %v539
    %616 = vmatpush1.msra.mxu0 %v538
    %617 = vmatprep.subr.mxu0 %v541
    %618 = vmatpush1.msra.mxu0 %v540
    %619 = vmatprep.subr.mxu0 %v543
    %620 = vmatpush1.msra.mxu0 %v542
    %621 = vmatprep.subr.mxu0 %v545
    %622 = vmatpush1.msra.mxu0 %v544
    %623 = vmatprep.subr.mxu0 %v547
    %624 = vmatpush1.msra.mxu0 %v546
    %625 = vmatprep.subr.mxu0 %v549
    %626 = vmatpush1.msra.mxu0 %v548
    %627 = vmatprep.subr.mxu0 %v551
    %628 = vmatpush1.msra.mxu0 %v550
    %629 = vmatprep.subr.mxu0 %v553
    %630 = vmatpush1.msra.mxu0 %v552
    %631 = vmatprep.subr.mxu0 %v555
    %632 = vmatpush1.msra.mxu0 %v554
    %633 = vmatprep.subr.mxu0 %v557
    %634 = vmatpush1.msra.mxu0 %v556
    %635 = vmatprep.subr.mxu0 %v559
    %636 = vmatpush1.msra.mxu0 %v558
    %637 = vmatprep.subr.mxu0 %v561
    %638 = vmatpush1.msra.mxu0 %v560
    %639 = vmatprep.subr.mxu0 0.0
    %640 = vmatpush1.msra.mxu0 0.0
    %641 = vmatprep.subr.mxu0 0.0
    %642 = vmatpush1.msra.mxu0 0.0
    %643 = vmatprep.mubr.f32.mxu0 %v577
    %644 = vmatmul.mubr.f32.gmra.mrb[0].mxu0 %v500
    %v645 = vpop.f32.mrb[0].mxu0
    %v646 = vadd.f32 %v568, %v645
    %v647 = vpop.f32.mrb[0].mxu0
    %v648 = vadd.f32 %v572, %v647
    %649 = vdwg.mxu0
    %v650 = vlaneseq
    %v651 = vand.u32 %v650, 127
    %v652 = vadd.s32 %v651, 128
    %vm653 = vcmp.lt.s32.totalorder %v651, 96
    %vm654 = vcmp.lt.s32.totalorder %v652, 96
    %vm655 = vcmp.lt.s32.totalorder %v651, 192
    %vm656 = vcmp.lt.s32.totalorder %v652, 192
    %v657 = vmul.f32 %v646, 1.442695
    %v658 = vpow.pop %v657
    %v659 = vmul.f32 %v648, 1.442695
    %v660 = vpow.pop %v659
    %v661 = vtanh.pop %v646
    %v662 = vtanh.pop %v648
    %v663 = vsel %vm655, %v658, %v661
    %v664 = vsel %vm656, %v660, %v662
    %v665 = vsel %vm653, %v646, %v663
    %v666 = vsel %vm654, %v648, %v664
    %v669 = vcombine.low %v665, %v666
    %v671 = vunpack.c.l.s4 1966171168
    %v672 = vunpack.c.0.s8 %v671
    %v673 = vlaneseq
    %v674 = vshrl.u32 %v673, 7
    %v675 = vsub.s32 %v672, %v674
    %v676 = vrot.slane %v669, %v675
    %v678 = vunpack.c.l.s4 1966171168
    %v679 = vunpack.c.0.s8 %v678
    %v680 = vlaneseq
    %v681 = vshrl.u32 %v680, 7
    %v682 = vsub.s32 %v679, %v681
    %v683 = vrot.slane %v676, %v682
    %v685 = vlaneseq
    %vm686 = vcmp.ge.s32.totalorder %v685, 0
    %vm687 = vcmp.lt.s32.totalorder %v685, 240
    %vm688 = vmand %vm686, %vm687
    %689 = vst.msk [vmem:[%s6] sm:$0x3] %vm688, %v683
    // Predicated region
    $region42: #{social_state_predictor_forward.1} parent=1 // pred_check
      _
    $region43: #{social_state_predictor_forward.1} parent=1 // pred_check_branch
      %691 = sbr.rel (0) target = $region45
    $region44: #{social_state_predictor_forward.1} parent=1 // pred_region
      _
    $region45: #{social_state_predictor_forward.1} parent=1 // pred_fallthru
      _
    // Predicated region
    $region46: #{social_state_predictor_forward.1} parent=1 // pred_check
      _
    $region47: #{social_state_predictor_forward.1} parent=1 // pred_check_branch
      %693 = sbr.rel (0) target = $region49
    $region48: #{social_state_predictor_forward.1} parent=1 // pred_region
      _
    $region49: #{social_state_predictor_forward.1} parent=1 // pred_fallthru
      _
    %694 = vsyncpa [#allocation3], 1
    %695 = vsyncpa [#allocation5], 1
    %696 = vsyncpa [#allocation8], 1

</llo_original>
